<compile_context>
chip_gen: v7x
topology: tpu7x:2x2x1
jax: 0.10.0
libtpu: 0.0.40
codegen_flags: <defaults>
</compile_context>

<pallas_src>
import functools

import jax
import jax.numpy as jnp
from jax import lax
from jax.experimental import pallas as pl
from jax.experimental.pallas import tpu as pltpu


# ----------------------------- kernel ---------------------------------------


def _fused_critic_kernel(xp_ref, xa_ref,
                         w1p_ref, w1a_ref, b1_ref,
                         w2_ref, b2_ref,
                         w3t_ref, b3t_ref,
                         qt_ref):
    # Layer 1: split matmul replaces the host-side concat([processed, actions]).
    # bf16 operands, f32 MXU accumulation; bias + tanh in f32.
    z1 = (jnp.dot(xp_ref[...], w1p_ref[...], preferred_element_type=jnp.float32)
          + jnp.dot(xa_ref[...], w1a_ref[...], preferred_element_type=jnp.float32)
          + b1_ref[...])
    h1 = jnp.tanh(z1).astype(w2_ref.dtype)                       # (TB, 2H) bf16

    # Layer 2: block-diagonal packed weights (both critics at once).
    z2 = jnp.dot(h1, w2_ref[...], preferred_element_type=jnp.float32) + b2_ref[...]
    h2 = jnp.tanh(z2).astype(w3t_ref.dtype)                      # (TB, 2H) bf16

    # Layer 3 (lane-dense, transposed): (8, 2H) x (TB, 2H) contracting the last
    # dims -> (8, TB) with batch on lanes (rows 0/1 = q1/q2, rest zero-padded).
    qt = lax.dot_general(w3t_ref[...], h2,
                         dimension_numbers=(((1,), (1,)), ((), ())),
                         preferred_element_type=jnp.float32) + b3t_ref[...]
    qt_ref[...] = qt.astype(qt_ref.dtype)


# --------------------------- host-side helpers -------------------------------

_HEAD_ROWS = 8  # sublane-padded head: rows 0/1 carry q1/q2, rows 2..7 are zero


def pack_critic_params(params, processed_dim, compute_dtype=jnp.bfloat16):
    """Fuse the twin critics into one packed MLP. Done once, offline.

    Input weights wN are (in_features, out_features); biases bN are (1, out_features).
    Matmul operands are stored in `compute_dtype` (bf16); biases stay f32.
    """
    c1, c2 = params["critic1"], params["critic2"]
    H = c1["w2"].shape[0]
    zhh = jnp.zeros((H, H), jnp.float32)
    zh1 = jnp.zeros((H, 1), jnp.float32)

    w1_cat = jnp.concatenate([c1["w1"], c2["w1"]], axis=1)            # (D_in, 2H)
    # TODO(synk): if num_hidden grows to >= MXU width, stack the twins on a
    # leading (2, H, H) axis instead of block-diagonal packing (avoids zero MACs).
    w2_cat = jnp.block([[c1["w2"], zhh], [zhh, c2["w2"]]])            # (2H, 2H)
    w3_cat = jnp.block([[c1["w3"], zh1], [zh1, c2["w3"]]])            # (2H, 2)
    b3_cat = jnp.concatenate([c1["b3"], c2["b3"]], axis=1)            # (1, 2)

    # Transposed + sublane-padded head for the lane-dense output path.
    w3t = jnp.zeros((_HEAD_ROWS, 2 * H), jnp.float32).at[:2].set(w3_cat.T)
    b3t = jnp.zeros((_HEAD_ROWS, 1), jnp.float32).at[:2].set(b3_cat.T)

    return {
        "w1p": w1_cat[:processed_dim].astype(compute_dtype),          # (Dp, 2H)
        "w1a": w1_cat[processed_dim:].astype(compute_dtype),          # (Da, 2H)
        "b1": jnp.concatenate([c1["b1"], c2["b1"]], axis=1),          # (1, 2H) f32
        "w2": w2_cat.astype(compute_dtype),                           # (2H, 2H)
        "b2": jnp.concatenate([c1["b2"], c2["b2"]], axis=1),          # (1, 2H) f32
        "w3t": w3t.astype(compute_dtype),                             # (8, 2H)
        "b3t": b3t,                                                   # (8, 1)  f32
    }


@functools.partial(jax.jit, static_argnames=("block_b",))
def critic_forward(processed, actions, packed, block_b=2048):
    """Fused twin-critic forward. Returns (q1, q2), each (B, 1) float32."""
    B, Dp = processed.shape
    Da = actions.shape[1]
    cdt = packed["w1p"].dtype

    # Stream activations in the matmul dtype (bf16) - halves HBM traffic.
    xp = processed.astype(cdt)
    xa = actions.astype(cdt)

    # Batch tile: whole batch when it fits one fat tile, else a lane/sublane
    # aligned block_b tile with a ragged last tile (NO host-side padding).
    if B <= block_b:
        TB = B
    else:
        TB = max((block_b // 128) * 128, 128)
    grid = (pl.cdiv(B, TB),)

    def act_spec(d):
        # Activations tile over batch (sublane axis).
        return pl.BlockSpec((TB, d), lambda i: (i, 0))

    def resident_spec(arr):
        # Same block index every grid step -> weights stay VMEM-resident.
        return pl.BlockSpec(arr.shape, lambda i: (0, 0))

    qt = pl.pallas_call(
        _fused_critic_kernel,
        out_shape=jax.ShapeDtypeStruct((_HEAD_ROWS, B), jnp.float32),
        grid=grid,
        in_specs=[
            act_spec(Dp),
            act_spec(Da),
            resident_spec(packed["w1p"]),
            resident_spec(packed["w1a"]),
            resident_spec(packed["b1"]),
            resident_spec(packed["w2"]),
            resident_spec(packed["b2"]),
            resident_spec(packed["w3t"]),
            resident_spec(packed["b3t"]),
        ],
        # Lane-dense output: batch lives on the lane axis -> unmasked stores.
        out_specs=pl.BlockSpec((_HEAD_ROWS, TB), lambda i: (0, i)),
        compiler_params=pltpu.CompilerParams(
            dimension_semantics=("parallel",)),
    )(xp, xa,
      packed["w1p"], packed["w1a"], packed["b1"],
      packed["w2"], packed["b2"],
      packed["w3t"], packed["b3t"])

    q1 = qt[0, :, None]
    q2 = qt[1, :, None]
    return q1, q2


# ------------------------------ init / reference -----------------------------


def init_linear(key, fan_in, fan_out):
    # Mimics torch.nn.Linear's default U(-1/sqrt(fan_in), +1/sqrt(fan_in)).
    kw, kb = jax.random.split(key)
    bound = 1.0 / (fan_in ** 0.5)
    w = jax.random.uniform(kw, (fan_in, fan_out), jnp.float32, -bound, bound)
    b = jax.random.uniform(kb, (1, fan_out), jnp.float32, -bound, bound)
    return w, b


def init_critic_params(key, num_processed, num_hidden):
    keys = jax.random.split(key, 6)
    w1a, b1a = init_linear(keys[0], num_processed, num_hidden)
    w2a, b2a = init_linear(keys[1], num_hidden, num_hidden)
    w3a, b3a = init_linear(keys[2], num_hidden, 1)
    w1b, b1b = init_linear(keys[3], num_processed, num_hidden)
    w2b, b2b = init_linear(keys[4], num_hidden, num_hidden)
    w3b, b3b = init_linear(keys[5], num_hidden, 1)
    return {
        "critic1": {"w1": w1a, "b1": b1a, "w2": w2a, "b2": b2a, "w3": w3a, "b3": b3a},
        "critic2": {"w1": w1b, "b1": b1b, "w2": w2b, "b2": b2b, "w3": w3b, "b3": b3b},
    }


def reference_forward(processed, actions, params, compute_dtype=jnp.float32):
    # Pure-JAX reference (unfused, matches the PyTorch module math).
    cd = compute_dtype
    x = jnp.concatenate([processed, actions], axis=1)

    def mlp(p):
        h1 = jnp.tanh(jnp.dot(x.astype(cd), p["w1"].astype(cd),
                              preferred_element_type=jnp.float32) + p["b1"])
        h2 = jnp.tanh(jnp.dot(h1.astype(cd), p["w2"].astype(cd),
                              preferred_element_type=jnp.float32) + p["b2"])
        return jnp.dot(h2.astype(cd), p["w3"].astype(cd),
                       preferred_element_type=jnp.float32) + p["b3"]

    return mlp(params["critic1"]), mlp(params["critic2"])


# ---------------------------------- demo --------------------------------------


if __name__ == "__main__":
    # Small deterministic example consistent with the module:
    #   processed_dim = 24, action_dim = 8 -> num_processed (MLP input) = 32
    #   num_hidden = 32, batch = 8
    B, Dp, Da, H = 8, 24, 8, 32
    D_in = Dp + Da

    key = jax.random.PRNGKey(0)
    k_proc, k_act, k_params = jax.random.split(key, 3)

    processed = jax.random.normal(k_proc, (B, Dp), jnp.float32)
    actions = jax.random.normal(k_act, (B, Da), jnp.float32)
    params = init_critic_params(k_params, D_in, H)

    # One-time offline weight packing (fuses the twin critics, casts to bf16).
    packed = pack_critic_params(params, Dp)

    q1, q2 = critic_forward(processed, actions, packed)
    jax.block_until_ready((q1, q2))

    assert q1.shape == (B, 1) and q2.shape == (B, 1)

    # Tight check against a bf16-compute reference (same quantization as kernel).
    r1b, r2b = reference_forward(processed, actions, params, jnp.bfloat16)
    assert jnp.allclose(q1, r1b, atol=1e-2, rtol=1e-2), "critic1 mismatch (bf16 ref)"
    assert jnp.allclose(q2, r2b, atol=1e-2, rtol=1e-2), "critic2 mismatch (bf16 ref)"

    # Loose check against the full-f32 reference (bf16 streaming approximation).
    r1f, r2f = reference_forward(processed, actions, params, jnp.float32)
    assert jnp.allclose(q1, r1f, atol=5e-2, rtol=5e-2), "critic1 mismatch (f32 ref)"
    assert jnp.allclose(q2, r2f, atol=5e-2, rtol=5e-2), "critic2 mismatch (f32 ref)"

    print("KERNEL_OK")
</pallas_src>

<mosaic_0001>
module attributes {stable_mosaic.version = 11 : i64} {
  func.func @_fused_critic_kernel(%arg0: i32, %arg1: memref<8x24xbf16, #tpu.memory_space<vmem>>, %arg2: memref<8x8xbf16, #tpu.memory_space<vmem>>, %arg3: memref<24x64xbf16, #tpu.memory_space<vmem>>, %arg4: memref<8x64xbf16, #tpu.memory_space<vmem>>, %arg5: memref<1x64xf32, #tpu.memory_space<vmem>>, %arg6: memref<64x64xbf16, #tpu.memory_space<vmem>>, %arg7: memref<1x64xf32, #tpu.memory_space<vmem>>, %arg8: memref<8x64xbf16, #tpu.memory_space<vmem>>, %arg9: memref<8x1xf32, #tpu.memory_space<vmem>>, %arg10: memref<8x8xf32, #tpu.memory_space<vmem>>) attributes {dimension_semantics = [#tpu.dimension_semantics<parallel>], iteration_bounds = array<i64: 1>, scalar_prefetch = 0 : i64, scratch_operands = 0 : i64, tpu.core_type = #tpu.core_type<tc>, window_params = [{transform_indices = @transform_0, window_bounds = array<i64: 8, 24>}, {transform_indices = @transform_1, window_bounds = array<i64: 8, 8>}, {pipeline_mode = #tpu.pipeline_mode<synchronous>, transform_indices = @transform_2, window_bounds = array<i64: 24, 64>}, {pipeline_mode = #tpu.pipeline_mode<synchronous>, transform_indices = @transform_3, window_bounds = array<i64: 8, 64>}, {pipeline_mode = #tpu.pipeline_mode<synchronous>, transform_indices = @transform_4, window_bounds = array<i64: 1, 64>}, {pipeline_mode = #tpu.pipeline_mode<synchronous>, transform_indices = @transform_5, window_bounds = array<i64: 64, 64>}, {pipeline_mode = #tpu.pipeline_mode<synchronous>, transform_indices = @transform_6, window_bounds = array<i64: 1, 64>}, {pipeline_mode = #tpu.pipeline_mode<synchronous>, transform_indices = @transform_7, window_bounds = array<i64: 8, 64>}, {pipeline_mode = #tpu.pipeline_mode<synchronous>, transform_indices = @transform_8, window_bounds = array<i64: 8, 1>}, {transform_indices = @transform_9, window_bounds = array<i64: 8, 8>}]} {
    %c0 = arith.constant 0 : index
    %c0_0 = arith.constant 0 : index
    %0 = vector.load %arg1[%c0, %c0_0] : memref<8x24xbf16, #tpu.memory_space<vmem>>, vector<8x24xbf16>
    %c0_1 = arith.constant 0 : index
    %c0_2 = arith.constant 0 : index
    %1 = vector.load %arg3[%c0_1, %c0_2] : memref<24x64xbf16, #tpu.memory_space<vmem>>, vector<24x64xbf16>
    %cst = arith.constant dense<0.000000e+00> : vector<8x64xf32>
    %2 = tpu.matmul %0, %1, %cst {dimension_numbers = #tpu.dot_dimension_numbers<[1], [0], [0], [1], [0, 0, 1, 1], [], []>} : vector<8x24xbf16>, vector<24x64xbf16>, vector<8x64xf32> -> vector<8x64xf32>
    %c0_3 = arith.constant 0 : index
    %c0_4 = arith.constant 0 : index
    %3 = vector.load %arg2[%c0_3, %c0_4] : memref<8x8xbf16, #tpu.memory_space<vmem>>, vector<8x8xbf16>
    %c0_5 = arith.constant 0 : index
    %c0_6 = arith.constant 0 : index
    %4 = vector.load %arg4[%c0_5, %c0_6] : memref<8x64xbf16, #tpu.memory_space<vmem>>, vector<8x64xbf16>
    %cst_7 = arith.constant dense<0.000000e+00> : vector<8x64xf32>
    %5 = tpu.matmul %3, %4, %cst_7 {dimension_numbers = #tpu.dot_dimension_numbers<[1], [0], [0], [1], [0, 0, 1, 1], [], []>} : vector<8x8xbf16>, vector<8x64xbf16>, vector<8x64xf32> -> vector<8x64xf32>
    %6 = arith.addf %2, %5 : vector<8x64xf32>
    %c0_8 = arith.constant 0 : index
    %c0_9 = arith.constant 0 : index
    %7 = vector.load %arg5[%c0_8, %c0_9] : memref<1x64xf32, #tpu.memory_space<vmem>>, vector<1x64xf32>
    %8 = vector.broadcast %7 : vector<1x64xf32> to vector<8x64xf32>
    %9 = arith.addf %6, %8 : vector<8x64xf32>
    %10 = math.tanh %9 : vector<8x64xf32>
    %11 = arith.truncf %10 : vector<8x64xf32> to vector<8x64xbf16>
    %c0_10 = arith.constant 0 : index
    %c0_11 = arith.constant 0 : index
    %12 = vector.load %arg6[%c0_10, %c0_11] : memref<64x64xbf16, #tpu.memory_space<vmem>>, vector<64x64xbf16>
    %cst_12 = arith.constant dense<0.000000e+00> : vector<8x64xf32>
    %13 = tpu.matmul %11, %12, %cst_12 {dimension_numbers = #tpu.dot_dimension_numbers<[1], [0], [0], [1], [0, 0, 1, 1], [], []>} : vector<8x64xbf16>, vector<64x64xbf16>, vector<8x64xf32> -> vector<8x64xf32>
    %c0_13 = arith.constant 0 : index
    %c0_14 = arith.constant 0 : index
    %14 = vector.load %arg7[%c0_13, %c0_14] : memref<1x64xf32, #tpu.memory_space<vmem>>, vector<1x64xf32>
    %15 = vector.broadcast %14 : vector<1x64xf32> to vector<8x64xf32>
    %16 = arith.addf %13, %15 : vector<8x64xf32>
    %17 = math.tanh %16 : vector<8x64xf32>
    %18 = arith.truncf %17 : vector<8x64xf32> to vector<8x64xbf16>
    %c0_15 = arith.constant 0 : index
    %c0_16 = arith.constant 0 : index
    %19 = vector.load %arg8[%c0_15, %c0_16] : memref<8x64xbf16, #tpu.memory_space<vmem>>, vector<8x64xbf16>
    %cst_17 = arith.constant dense<0.000000e+00> : vector<8x8xf32>
    %20 = tpu.matmul %19, %18, %cst_17 {dimension_numbers = #tpu.dot_dimension_numbers<[1], [1], [0], [0], [0, 0, 1, 0], [], []>} : vector<8x64xbf16>, vector<8x64xbf16>, vector<8x8xf32> -> vector<8x8xf32>
    %c0_18 = arith.constant 0 : index
    %c0_19 = arith.constant 0 : index
    %21 = vector.load %arg9[%c0_18, %c0_19] : memref<8x1xf32, #tpu.memory_space<vmem>>, vector<8x1xf32>
    %22 = vector.broadcast %21 : vector<8x1xf32> to vector<8x8xf32>
    %23 = arith.addf %20, %22 : vector<8x8xf32>
    %c0_20 = arith.constant 0 : index
    %c0_21 = arith.constant 0 : index
    %24 = vector.load %arg10[%c0_20, %c0_21] : memref<8x8xf32, #tpu.memory_space<vmem>>, vector<8x8xf32>
    tpu.vector_store %arg10[%c0_20, %c0_21], %23 {strides = array<i32>} : memref<8x8xf32, #tpu.memory_space<vmem>>, vector<8x8xf32>,
    return
  }
  func.func @transform_0(%arg0: i32) -> (i32, i32) {
    %c0_i32 = arith.constant 0 : i32
    %c0_i32_0 = arith.constant 0 : i32
    return %arg0, %c0_i32 : i32, i32
  }
  func.func @transform_1(%arg0: i32) -> (i32, i32) {
    %c0_i32 = arith.constant 0 : i32
    %c0_i32_0 = arith.constant 0 : i32
    return %arg0, %c0_i32 : i32, i32
  }
  func.func @transform_2(%arg0: i32) -> (i32, i32) {
    %c0_i32 = arith.constant 0 : i32
    %c0_i32_0 = arith.constant 0 : i32
    %c0_i32_1 = arith.constant 0 : i32
    return %c0_i32, %c0_i32_0 : i32, i32
  }
  func.func @transform_3(%arg0: i32) -> (i32, i32) {
    %c0_i32 = arith.constant 0 : i32
    %c0_i32_0 = arith.constant 0 : i32
    %c0_i32_1 = arith.constant 0 : i32
    return %c0_i32, %c0_i32_0 : i32, i32
  }
  func.func @transform_4(%arg0: i32) -> (i32, i32) {
    %c0_i32 = arith.constant 0 : i32
    %c0_i32_0 = arith.constant 0 : i32
    %c0_i32_1 = arith.constant 0 : i32
    return %c0_i32, %c0_i32_0 : i32, i32
  }
  func.func @transform_5(%arg0: i32) -> (i32, i32) {
    %c0_i32 = arith.constant 0 : i32
    %c0_i32_0 = arith.constant 0 : i32
    %c0_i32_1 = arith.constant 0 : i32
    return %c0_i32, %c0_i32_0 : i32, i32
  }
  func.func @transform_6(%arg0: i32) -> (i32, i32) {
    %c0_i32 = arith.constant 0 : i32
    %c0_i32_0 = arith.constant 0 : i32
    %c0_i32_1 = arith.constant 0 : i32
    return %c0_i32, %c0_i32_0 : i32, i32
  }
  func.func @transform_7(%arg0: i32) -> (i32, i32) {
    %c0_i32 = arith.constant 0 : i32
    %c0_i32_0 = arith.constant 0 : i32
    %c0_i32_1 = arith.constant 0 : i32
    return %c0_i32, %c0_i32_0 : i32, i32
  }
  func.func @transform_8(%arg0: i32) -> (i32, i32) {
    %c0_i32 = arith.constant 0 : i32
    %c0_i32_0 = arith.constant 0 : i32
    %c0_i32_1 = arith.constant 0 : i32
    return %c0_i32, %c0_i32_0 : i32, i32
  }
  func.func @transform_9(%arg0: i32) -> (i32, i32) {
    %c0_i32 = arith.constant 0 : i32
    %c0_i32_0 = arith.constant 0 : i32
    return %c0_i32, %arg0 : i32, i32
  }
}

</mosaic_0001>

<llo_original>
// kernel: critic_forward.1
$region0: #{critic_forward.1}
  #allocation0 [shape = 'u32[]', space=smem, size = 0x4, offset = 0x4, fixed_abs, tag = 'smem constant byte address 0x4 - core index']
  #allocation1 [shape = 'u32[144,128]{1,0:T(1,128)}', space=vmem, size = 0x12000, scoped, tag = 'internal scratch']
  %s0 = inlined_call_operand.vmem [shape: bf16[8,24], index: 0, kind: input, shape index: {}]
  %s1 = inlined_call_operand.vmem [shape: bf16[8,8], index: 1, kind: input, shape index: {}]
  %s2 = inlined_call_operand.vmem [shape: bf16[24,64], index: 2, kind: input, shape index: {}]
  %s3 = inlined_call_operand.vmem [shape: bf16[8,64], index: 3, kind: input, shape index: {}]
  %s4 = inlined_call_operand.vmem [shape: f32[1,64], index: 4, kind: input, shape index: {}]
  %s5 = inlined_call_operand.vmem [shape: bf16[64,64], index: 5, kind: input, shape index: {}]
  %s6 = inlined_call_operand.vmem [shape: f32[1,64], index: 6, kind: input, shape index: {}]
  %s7 = inlined_call_operand.vmem [shape: bf16[8,64], index: 7, kind: input, shape index: {}]
  %s8 = inlined_call_operand.vmem [shape: f32[8,1], index: 8, kind: input, shape index: {}]
  %s9 = inlined_call_operand.vmem [shape: f32[8,8], index: 9, kind: output, shape index: {}]
  %s10 = sld [smem:[#allocation0]]
  $region46: #{critic_forward.1} parent=0
    _
  %s12 = ssub.s32 1, %s10
  %s13 = scalar_select 0, %s12, %s10
  // Predicated region
  $region2: #{critic_forward.1} parent=0 // pred_check
    _
  $region3: #{critic_forward.1} parent=0 // pred_check_branch
    %15 = sbr.rel (0) target = $region5
  $region4: #{critic_forward.1} parent=0 // pred_region
    _
  $region5: #{critic_forward.1} parent=0 // pred_fallthru
    _
  // Predicated region
  $region6: #{critic_forward.1} parent=0 // pred_check
    _
  $region7: #{critic_forward.1} parent=0 // pred_check_branch
    %17 = sbr.rel (0) target = $region9
  $region8: #{critic_forward.1} parent=0 // pred_region
    _
  $region9: #{critic_forward.1} parent=0 // pred_fallthru
    _
  // Predicated region
  $region10: #{critic_forward.1} parent=0 // pred_check
    _
  $region11: #{critic_forward.1} parent=0 // pred_check_branch
    %19 = sbr.rel (0) target = $region13
  $region12: #{critic_forward.1} parent=0 // pred_region
    _
  $region13: #{critic_forward.1} parent=0 // pred_fallthru
    _
  // Predicated region
  $region14: #{critic_forward.1} parent=0 // pred_check
    _
  $region15: #{critic_forward.1} parent=0 // pred_check_branch
    %21 = sbr.rel (0) target = $region17
  $region16: #{critic_forward.1} parent=0 // pred_region
    _
  $region17: #{critic_forward.1} parent=0 // pred_fallthru
    _
  // Predicated region
  $region18: #{critic_forward.1} parent=0 // pred_check
    _
  $region19: #{critic_forward.1} parent=0 // pred_check_branch
    %23 = sbr.rel (0) target = $region21
  $region20: #{critic_forward.1} parent=0 // pred_region
    _
  $region21: #{critic_forward.1} parent=0 // pred_fallthru
    _
  // Predicated region
  $region22: #{critic_forward.1} parent=0 // pred_check
    _
  $region23: #{critic_forward.1} parent=0 // pred_check_branch
    %25 = sbr.rel (0) target = $region25
  $region24: #{critic_forward.1} parent=0 // pred_region
    _
  $region25: #{critic_forward.1} parent=0 // pred_fallthru
    _
  // Predicated region
  $region26: #{critic_forward.1} parent=0 // pred_check
    _
  $region27: #{critic_forward.1} parent=0 // pred_check_branch
    %27 = sbr.rel (0) target = $region29
  $region28: #{critic_forward.1} parent=0 // pred_region
    _
  $region29: #{critic_forward.1} parent=0 // pred_fallthru
    _
  // Predicated region
  $region30: #{critic_forward.1} parent=0 // pred_check
    _
  $region31: #{critic_forward.1} parent=0 // pred_check_branch
    %29 = sbr.rel (0) target = $region33
  $region32: #{critic_forward.1} parent=0 // pred_region
    _
  $region33: #{critic_forward.1} parent=0 // pred_fallthru
    _
  // Predicated region
  $region34: #{critic_forward.1} parent=0 // pred_check
    _
  $region35: #{critic_forward.1} parent=0 // pred_check_branch
    %31 = sbr.rel (0) target = $region37
  $region36: #{critic_forward.1} parent=0 // pred_region
    _
  $region37: #{critic_forward.1} parent=0 // pred_fallthru
    _
  %v33 = vld [vmem:[%s0] sm:$0xf]
  %v34 = vld [vmem:[%s2] sm:$0xf]
  %v35 = vld [vmem:[%s2 + $0x4] sm:$0xf]
  %v36 = vld [vmem:[%s2 + $0x8] sm:$0xf]
  %v37 = vld [vmem:[%s1] sm:$0xf]
  %v38 = vld [vmem:[%s3] sm:$0xf]
  %vm39 = vcmask 64512
  %v41 = vsel %vm39, %v37, 0
  %vm43 = vcmask 1043456
  %v45 = vsel %vm43, %v38, 0
  %47 = vmatprep.subr.bf16.mxu0 0
  %48 = vmatpush1.bf16.msra.mxu0 %v45
  %49 = vmatprep.subr.bf16.mxu0 0
  %50 = vmatpush1.bf16.msra.mxu0 0
  %51 = vmatprep.subr.bf16.mxu0 0
  %52 = vmatpush1.bf16.msra.mxu0 0
  %53 = vmatprep.subr.bf16.mxu0 0
  %54 = vmatpush1.bf16.msra.mxu0 0
  %55 = vmatprep.subr.bf16.mxu0 0
  %56 = vmatpush1.bf16.msra.mxu0 0
  %57 = vmatprep.subr.bf16.mxu0 0
  %58 = vmatpush1.bf16.msra.mxu0 0
  %59 = vmatprep.subr.bf16.mxu0 0
  %60 = vmatpush1.bf16.msra.mxu0 0
  %61 = vmatprep.subr.bf16.mxu0 0
  %62 = vmatpush1.bf16.msra.mxu0 0
  %63 = vmatprep.subr.bf16.mxu0 0
  %64 = vmatpush1.bf16.msra.mxu0 0
  %65 = vmatprep.subr.bf16.mxu0 0
  %66 = vmatpush1.bf16.msra.mxu0 0
  %67 = vmatprep.subr.bf16.mxu0 0
  %68 = vmatpush1.bf16.msra.mxu0 0
  %69 = vmatprep.subr.bf16.mxu0 0
  %70 = vmatpush1.bf16.msra.mxu0 0
  %71 = vmatprep.subr.bf16.mxu0 0
  %72 = vmatpush1.bf16.msra.mxu0 0
  %73 = vmatprep.subr.bf16.mxu0 0
  %74 = vmatpush1.bf16.msra.mxu0 0
  %75 = vmatprep.subr.bf16.mxu0 0
  %76 = vmatpush1.bf16.msra.mxu0 0
  %77 = vmatprep.subr.bf16.mxu0 0
  %78 = vmatpush1.bf16.msra.mxu0 0
  %79 = vmatprep.mubr.bf16.mxu0 0
  %80 = vmatmul.mubr.bf16.gmra.mrb[0].mxu0 %v41
  %v81 = vpop.f32.mrb[0].mxu0
  %v82 = vadd.f32 0.0, %v81
  %v83 = vpop.f32.mrb[0].mxu0
  %v84 = vpop.f32.mrb[0].mxu0
  %v85 = vpop.f32.mrb[0].mxu0
  %86 = vdwg.mxu0
  %v90 = vunpack.c.l.b16 %v34
  %v91 = vunpack.c.l.b16 %v35
  %v92 = vunpack.c.l.b16 %v36
  %v93 = vpack.c.b16 %v91, %v90
  %v94 = vpack.c.b16 %v92, %v92
  %vm96 = vcmask 195584
  %v98 = vsel %vm96, %v33, 0
  %v101 = vsel %vm43, %v94, 0
  %103 = vmatprep.subr.bf16.mxu0 0
  %104 = vmatpush1.bf16.msra.mxu0 %v93
  %105 = vmatprep.subr.bf16.mxu0 0
  %106 = vmatpush1.bf16.msra.mxu0 %v101
  %107 = vmatprep.subr.bf16.mxu0 0
  %108 = vmatpush1.bf16.msra.mxu0 0
  %109 = vmatprep.subr.bf16.mxu0 0
  %110 = vmatpush1.bf16.msra.mxu0 0
  %111 = vmatprep.subr.bf16.mxu0 0
  %112 = vmatpush1.bf16.msra.mxu0 0
  %113 = vmatprep.subr.bf16.mxu0 0
  %114 = vmatpush1.bf16.msra.mxu0 0
  %115 = vmatprep.subr.bf16.mxu0 0
  %116 = vmatpush1.bf16.msra.mxu0 0
  %117 = vmatprep.subr.bf16.mxu0 0
  %118 = vmatpush1.bf16.msra.mxu0 0
  %119 = vmatprep.subr.bf16.mxu0 0
  %120 = vmatpush1.bf16.msra.mxu0 0
  %121 = vmatprep.subr.bf16.mxu0 0
  %122 = vmatpush1.bf16.msra.mxu0 0
  %123 = vmatprep.subr.bf16.mxu0 0
  %124 = vmatpush1.bf16.msra.mxu0 0
  %125 = vmatprep.subr.bf16.mxu0 0
  %126 = vmatpush1.bf16.msra.mxu0 0
  %127 = vmatprep.subr.bf16.mxu0 0
  %128 = vmatpush1.bf16.msra.mxu0 0
  %129 = vmatprep.subr.bf16.mxu0 0
  %130 = vmatpush1.bf16.msra.mxu0 0
  %131 = vmatprep.subr.bf16.mxu0 0
  %132 = vmatpush1.bf16.msra.mxu0 0
  %133 = vmatprep.subr.bf16.mxu0 0
  %134 = vmatpush1.bf16.msra.mxu0 0
  %135 = vmatprep.mubr.bf16.mxu0 0
  %136 = vmatmul.mubr.bf16.gmra.mrb[0].mxu0 %v98
  %v137 = vpop.f32.mrb[0].mxu0
  %v138 = vadd.f32 %v82, %v137
  %v139 = vpop.f32.mrb[0].mxu0
  %v140 = vpop.f32.mrb[0].mxu0
  %v141 = vpop.f32.mrb[0].mxu0
  %142 = vdwg.mxu0
  %v143 = vld [vmem:[%s4] sm:$0x1]
  %v145 = vlaneseq
  %v146 = vshrl.u32 %v145, 7
  %v147 = vsub.s32 0, %v146
  %v148 = vrot.slane %v143, %v147
  %v150 = vadd.f32 %v138, %v148
  %v151 = vtanh.pop %v150
  %v152 = vpack.c.bf16 %v151, %v151
  %v153 = vld [vmem:[%s5] sm:$0xf]
  %v154 = vld [vmem:[%s5 + $0x4] sm:$0xf]
  %v155 = vld [vmem:[%s5 + $0x8] sm:$0xf]
  %v156 = vld [vmem:[%s5 + $0xc] sm:$0xf]
  %v157 = vld [vmem:[%s5 + $0x10] sm:$0xf]
  %v158 = vld [vmem:[%s5 + $0x14] sm:$0xf]
  %v159 = vld [vmem:[%s5 + $0x18] sm:$0xf]
  %v160 = vld [vmem:[%s5 + $0x1c] sm:$0xf]
  %v161 = vld [vmem:[%s6] sm:$0x1]
  %v163 = vlaneseq
  %v164 = vshrl.u32 %v163, 7
  %v165 = vsub.s32 0, %v164
  %v166 = vrot.slane %v161, %v165
  %v176 = vunpack.c.l.b16 %v153
  %v177 = vunpack.c.l.b16 %v154
  %v178 = vunpack.c.l.b16 %v155
  %v179 = vunpack.c.l.b16 %v156
  %v180 = vunpack.c.l.b16 %v157
  %v181 = vunpack.c.l.b16 %v158
  %v182 = vunpack.c.l.b16 %v159
  %v183 = vunpack.c.l.b16 %v160
  %v184 = vpack.c.b16 %v177, %v176
  %v185 = vpack.c.b16 %v179, %v178
  %v186 = vpack.c.b16 %v181, %v180
  %v187 = vpack.c.b16 %v183, %v182
  %vm192 = vcmask 523264
  %v194 = vsel %vm192, %v152, 0
  %196 = vmatprep.subr.bf16.mxu0 0
  %197 = vmatpush1.bf16.msra.mxu0 %v184
  %198 = vmatprep.subr.bf16.mxu0 0
  %199 = vmatpush1.bf16.msra.mxu0 %v185
  %200 = vmatprep.subr.bf16.mxu0 0
  %201 = vmatpush1.bf16.msra.mxu0 %v186
  %202 = vmatprep.subr.bf16.mxu0 0
  %203 = vmatpush1.bf16.msra.mxu0 %v187
  %204 = vmatprep.subr.bf16.mxu0 0
  %205 = vmatpush1.bf16.msra.mxu0 0
  %206 = vmatprep.subr.bf16.mxu0 0
  %207 = vmatpush1.bf16.msra.mxu0 0
  %208 = vmatprep.subr.bf16.mxu0 0
  %209 = vmatpush1.bf16.msra.mxu0 0
  %210 = vmatprep.subr.bf16.mxu0 0
  %211 = vmatpush1.bf16.msra.mxu0 0
  %212 = vmatprep.subr.bf16.mxu0 0
  %213 = vmatpush1.bf16.msra.mxu0 0
  %214 = vmatprep.subr.bf16.mxu0 0
  %215 = vmatpush1.bf16.msra.mxu0 0
  %216 = vmatprep.subr.bf16.mxu0 0
  %217 = vmatpush1.bf16.msra.mxu0 0
  %218 = vmatprep.subr.bf16.mxu0 0
  %219 = vmatpush1.bf16.msra.mxu0 0
  %220 = vmatprep.subr.bf16.mxu0 0
  %221 = vmatpush1.bf16.msra.mxu0 0
  %222 = vmatprep.subr.bf16.mxu0 0
  %223 = vmatpush1.bf16.msra.mxu0 0
  %224 = vmatprep.subr.bf16.mxu0 0
  %225 = vmatpush1.bf16.msra.mxu0 0
  %226 = vmatprep.subr.bf16.mxu0 0
  %227 = vmatpush1.bf16.msra.mxu0 0
  %228 = vmatprep.mubr.bf16.mxu0 0
  %229 = vmatmul.mubr.bf16.gmra.mrb[0].mxu0 %v194
  %v230 = vpop.f32.mrb[0].mxu0
  %v231 = vadd.f32 %v166, %v230
  %v232 = vpop.f32.mrb[0].mxu0
  %v233 = vpop.f32.mrb[0].mxu0
  %v234 = vpop.f32.mrb[0].mxu0
  %235 = vdwg.mxu0
  %v236 = vtanh.pop %v231
  %v237 = vpack.c.bf16 %v236, %v236
  %v238 = vld [vmem:[%s7] sm:$0xf]
  %v239 = vld [vmem:[%s8] sm:$0xff]
  %241 = vset.pattern.permute.xlu0 0
  %242 = vperm.xlu0 %241, %v239
  %v243 = vpop.permute.xlu0 %242
  %v246 = vsel %vm192, %v238, 0
  %v249 = vsel %vm192, %v237, 0
  %251 = vmatprep.subr.bf16.mxu0 0
  %252 = vmatpush1.bf16.xpose.msra.mxu0 %v249
  %253 = vmatprep.subr.bf16.mxu0 0
  %254 = vmatpush1.bf16.xpose.msra.mxu0 0
  %255 = vmatprep.subr.bf16.mxu0 0
  %256 = vmatpush1.bf16.xpose.msra.mxu0 0
  %257 = vmatprep.subr.bf16.mxu0 0
  %258 = vmatpush1.bf16.xpose.msra.mxu0 0
  %259 = vmatprep.subr.bf16.mxu0 0
  %260 = vmatpush1.bf16.xpose.msra.mxu0 0
  %261 = vmatprep.subr.bf16.mxu0 0
  %262 = vmatpush1.bf16.xpose.msra.mxu0 0
  %263 = vmatprep.subr.bf16.mxu0 0
  %264 = vmatpush1.bf16.xpose.msra.mxu0 0
  %265 = vmatprep.subr.bf16.mxu0 0
  %266 = vmatpush1.bf16.xpose.msra.mxu0 0
  %267 = vmatprep.subr.bf16.mxu0 0
  %268 = vmatpush1.bf16.xpose.msra.mxu0 0
  %269 = vmatprep.subr.bf16.mxu0 0
  %270 = vmatpush1.bf16.xpose.msra.mxu0 0
  %271 = vmatprep.subr.bf16.mxu0 0
  %272 = vmatpush1.bf16.xpose.msra.mxu0 0
  %273 = vmatprep.subr.bf16.mxu0 0
  %274 = vmatpush1.bf16.xpose.msra.mxu0 0
  %275 = vmatprep.subr.bf16.mxu0 0
  %276 = vmatpush1.bf16.xpose.msra.mxu0 0
  %277 = vmatprep.subr.bf16.mxu0 0
  %278 = vmatpush1.bf16.xpose.msra.mxu0 0
  %279 = vmatprep.subr.bf16.mxu0 0
  %280 = vmatpush1.bf16.xpose.msra.mxu0 0
  %281 = vmatprep.subr.bf16.mxu0 0
  %282 = vmatpush1.bf16.xpose.msra.mxu0 0
  %283 = vmatprep.mubr.bf16.mxu0 0
  %284 = vmatmul.mubr.bf16.gmra.mrb[0].mxu0 %v246
  %v285 = vpop.f32.mrb[0].mxu0
  %v286 = vadd.f32 %v243, %v285
  %v287 = vpop.f32.mrb[0].mxu0
  %v288 = vpop.f32.mrb[0].mxu0
  %v289 = vpop.f32.mrb[0].mxu0
  %290 = vdwg.mxu0
  %291 = vst.msk [vmem:[%s9] sm:$0xff] %vm39, %v286
  // Predicated region
  $region38: #{critic_forward.1} parent=0 // pred_check
    _
  $region39: #{critic_forward.1} parent=0 // pred_check_branch
    %293 = sbr.rel (0) target = $region41
  $region40: #{critic_forward.1} parent=0 // pred_region
    _
  $region41: #{critic_forward.1} parent=0 // pred_fallthru
    _
  // Predicated region
  $region42: #{critic_forward.1} parent=0 // pred_check
    _
  $region43: #{critic_forward.1} parent=0 // pred_check_branch
    %295 = sbr.rel (0) target = $region45
  $region44: #{critic_forward.1} parent=0 // pred_region
    _
  $region45: #{critic_forward.1} parent=0 // pred_fallthru
    _

</llo_original>
